<compile_context>
chip_gen: v5e
topology: v5e:2x2
jax: 0.10.0
libtpu: 0.0.40
codegen_flags: <defaults>
</compile_context>

<pallas_src>
import functools

import jax
import jax.numpy as jnp
from jax import lax
from jax.experimental import pallas as pl
from jax.experimental.pallas import tpu as pltpu

EPS = 1e-5            # PyTorch GroupNorm default
GROUP_ROWS = 16       # 4 channels per group * 4 kernel taps (kd, kh)


def _round_up(x, mult):
    return ((x + mult - 1) // mult) * mult


def _vmem_capacity_bytes():
    try:
        info = pltpu.get_tpu_info()
        cap = int(getattr(info, "vmem_capacity_bytes", 0))
        if cap > 0:
            return cap
    except Exception:
        pass
    return 64 * 1024 * 1024   # conservative fallback (v7x per-TC physical)


# ---------------- fused whole-sample kernel (matmul + GroupNorm + ReLU) --------

def _fused_kernel(x_ref, w_ref, b_ref, gamma_ref, beta_ref, gavg_ref, o_ref, *,
                  m_valid):
    # x_ref:   (1, Cin, Mp)  one sample; Mp is a multiple of 128 (zero padded)
    # w_ref:   (C4, Cin)     row = co*4 + kd*2 + kh
    # b/gamma/beta: (C4, 1)
    # gavg:    (C4, C4)      block-diagonal group-averaging matrix, 1/(16*M_valid)
    # o_ref:   (1, C4, Mp)   lane-dense single store
    x = x_ref[0]                                                    # (Cin, Mp)
    z = jnp.dot(w_ref[...], x, preferred_element_type=jnp.float32)  # (C4, Mp) f32

    # GroupNorm stats of y = z + b without materializing y.  Padded columns of
    # x are zero, hence padded columns of z are zero and do not bias the sums;
    # counts use the true M.
    b = b_ref[...]                                                  # (C4, 1)
    zs = jnp.sum(z, axis=1, keepdims=True)                          # (C4, 1)
    zss = jnp.sum(z * z, axis=1, keepdims=True)                     # (C4, 1)
    ys = zs + m_valid * b
    yss = zss + 2.0 * b * zs + m_valid * (b * b)

    # Vectorized per-group reduction on the (otherwise idle) MXU: no Python loop.
    mean = jnp.dot(gavg_ref[...], ys, preferred_element_type=jnp.float32)   # (C4,1)
    ex2 = jnp.dot(gavg_ref[...], yss, preferred_element_type=jnp.float32)   # (C4,1)
    var = jnp.maximum(ex2 - mean * mean, 0.0)       # clamp one-pass cancellation
    inv = lax.rsqrt(var + EPS)
    scale = gamma_ref[...] * inv
    shift = (b - mean) * scale + beta_ref[...]

    # bias + normalize + affine + ReLU fused into one pass, one full-width store.
    o_ref[0] = jnp.maximum(z * scale + shift, 0.0).astype(o_ref.dtype)


# ---------------- M-tiled kernel (scale/shift precomputed from x) --------------

def _tiled_kernel(x_ref, w_ref, scale_ref, shift_ref, o_ref):
    # x_ref: (1, Cin, tile_m)   w_ref: (C4, Cin)   scale/shift: (1, C4, 1)
    z = jnp.dot(w_ref[...], x_ref[0], preferred_element_type=jnp.float32)
    o_ref[0] = jnp.maximum(z * scale_ref[0] + shift_ref[0], 0.0).astype(o_ref.dtype)


def deconv_block_forward(x, weight, bias, gamma, beta, *,
                         return_ncdhw=True, out_dtype=None, force_tiled=False):
    """x: (N, Cin, D, H, W).  weight: (Cin, Cout, 2, 2, 1) (PyTorch layout).

    Returns (N, Cout, 2D, 2H, W) if return_ncdhw, else the kernel-native
    channels-blocked (N, Cout, 2, 2, D, H, W) layout (no extra HBM layout pass).
    Output dtype follows x unless out_dtype is given (bf16 I/O supported).
    """
    n, cin, d, h, w = x.shape
    cout = weight.shape[1]
    assert cout % 4 == 0, "GroupNorm(num_groups=cout//4) needs cout % 4 == 0"
    m = d * h * w
    c4 = cout * 4
    groups = cout // 4
    in_dtype = jnp.dtype(x.dtype)
    out_dtype = jnp.dtype(out_dtype) if out_dtype is not None else in_dtype

    # Free reshape (no transpose): per-sample (Cin, M) slabs straight from NCDHW.
    x_flat = x.reshape(n, cin, m)

    # Tiny one-time parameter packing (row index = co*4 + kd*2 + kh).
    w_t32 = weight.reshape(cin, c4).T.astype(jnp.float32)          # (C4, Cin)
    w_t = w_t32.astype(in_dtype)                                   # MXU-native dtype
    b_rep = jnp.repeat(bias.astype(jnp.float32), 4)                # (C4,)
    g_rep = jnp.repeat(gamma.astype(jnp.float32), 4)
    be_rep = jnp.repeat(beta.astype(jnp.float32), 4)

    # Per-generation VMEM budget (v6e: ~96 MiB, v7x: ~48 MiB) with headroom.
    cap = _vmem_capacity_bytes()
    budget = int(cap * 0.75)
    headroom = 8 * 1024 * 1024
    bx = in_dtype.itemsize
    bo = out_dtype.itemsize

    m128 = _round_up(m, 128)                                       # lane-dense
    # double-buffered in/out blocks + f32 z intermediate & temps + params
    fused_bytes = (2 * bx * cin * m128 + 2 * bo * c4 * m128 + 8 * c4 * m128
                   + 4 * (c4 * cin + c4 * c4 + 6 * c4))
    use_fused = (not force_tiled) and (fused_bytes + headroom <= budget)

    if use_fused:
        m_pad = m128
        xp = x_flat if m_pad == m else jnp.pad(x_flat, ((0, 0), (0, 0), (0, m_pad - m)))
        inv_cnt = 1.0 / float(GROUP_ROWS * m)
        rows = jnp.arange(c4) // GROUP_ROWS
        gavg = (rows[:, None] == rows[None, :]).astype(jnp.float32) * inv_cnt

        vmem_limit = int(min(budget, max(32 * 1024 * 1024, fused_bytes + headroom)))
        kernel = functools.partial(_fused_kernel, m_valid=float(m))
        y_flat = pl.pallas_call(
            kernel,
            out_shape=jax.ShapeDtypeStruct((n, c4, m_pad), out_dtype),
            grid_spec=pltpu.PrefetchScalarGridSpec(
                num_scalar_prefetch=0,
                grid=(n,),
                in_specs=[
                    pl.BlockSpec((1, cin, m_pad), lambda i: (i, 0, 0)),
                    pl.BlockSpec((c4, cin), lambda i: (0, 0)),
                    pl.BlockSpec((c4, 1), lambda i: (0, 0)),
                    pl.BlockSpec((c4, 1), lambda i: (0, 0)),
                    pl.BlockSpec((c4, 1), lambda i: (0, 0)),
                    pl.BlockSpec((c4, c4), lambda i: (0, 0)),
                ],
                out_specs=pl.BlockSpec((1, c4, m_pad), lambda i: (i, 0, 0)),
            ),
            compiler_params=pltpu.CompilerParams(
                dimension_semantics=("parallel",),
                vmem_limit_bytes=vmem_limit),
        )(xp, w_t, b_rep.reshape(c4, 1), g_rep.reshape(c4, 1),
          be_rep.reshape(c4, 1), gavg)
    else:
        # M-tiled path (v7x / large spatial): GroupNorm scale/shift are derived
        # from x alone (Cin row sums + Cin x Cin Gram), so the C4 x M output is
        # produced and written exactly once, tile by tile.
        x32 = x_flat.astype(jnp.float32)
        xs = jnp.sum(x32, axis=2)                                   # (N, Cin)
        gram = jnp.einsum("ncm,nkm->nck", x32, x32)                 # (N, Cin, Cin)
        ws = jnp.einsum("rc,nc->nr", w_t32, xs)                     # (N, C4)
        wgw = jnp.einsum("rc,nck,rk->nr", w_t32, gram, w_t32)       # (N, C4)
        ys = ws + float(m) * b_rep[None, :]
        yss = wgw + 2.0 * b_rep[None, :] * ws + float(m) * b_rep[None, :] ** 2
        inv_cnt = 1.0 / float(GROUP_ROWS * m)
        mean_g = ys.reshape(n, groups, GROUP_ROWS).sum(-1) * inv_cnt
        ex2_g = yss.reshape(n, groups, GROUP_ROWS).sum(-1) * inv_cnt
        inv_g = lax.rsqrt(jnp.maximum(ex2_g - mean_g * mean_g, 0.0) + EPS)
        mean_r = jnp.repeat(mean_g, GROUP_ROWS, axis=1)             # (N, C4)
        inv_r = jnp.repeat(inv_g, GROUP_ROWS, axis=1)
        scale = (g_rep[None, :] * inv_r).reshape(n, c4, 1)
        shift = ((b_rep[None, :] - mean_r) * (g_rep[None, :] * inv_r)
                 + be_rep[None, :]).reshape(n, c4, 1)

        per_col = 2 * bx * cin + 2 * bo * c4 + 8 * c4               # bytes / M column
        tile_m = max(128, min(1024, ((budget - headroom) // per_col) // 128 * 128))
        tile_m = min(tile_m, m128)
        m_pad = _round_up(m, tile_m)
        xp = x_flat if m_pad == m else jnp.pad(x_flat, ((0, 0), (0, 0), (0, m_pad - m)))
        vmem_limit = int(min(budget, max(32 * 1024 * 1024,
                                         per_col * tile_m + headroom)))

        y_flat = pl.pallas_call(
            _tiled_kernel,
            out_shape=jax.ShapeDtypeStruct((n, c4, m_pad), out_dtype),
            grid_spec=pltpu.PrefetchScalarGridSpec(
                num_scalar_prefetch=0,
                grid=(n, m_pad // tile_m),
                in_specs=[
                    pl.BlockSpec((1, cin, tile_m), lambda i, j: (i, 0, j)),
                    pl.BlockSpec((c4, cin), lambda i, j: (0, 0)),
                    pl.BlockSpec((1, c4, 1), lambda i, j: (i, 0, 0)),
                    pl.BlockSpec((1, c4, 1), lambda i, j: (i, 0, 0)),
                ],
                out_specs=pl.BlockSpec((1, c4, tile_m), lambda i, j: (i, 0, j)),
            ),
            compiler_params=pltpu.CompilerParams(
                # both axes independent -> shards across v7x's two TensorCores
                dimension_semantics=("parallel", "parallel"),
                vmem_limit_bytes=vmem_limit),
        )(xp, w_t, scale, shift)

    # Kernel-native layout (N, Cout, kd, kh, D, H, W): free reshape (+unpad slice).
    y_blocked = y_flat[:, :, :m].reshape(n, cout, 2, 2, d, h, w)
    if not return_ncdhw:
        return y_blocked

    # Module layout contract: interleave kd into D and kh into H.  Single XLA
    # layout pass (the input pre-transpose was already removed); consumers that
    # can take the blocked layout should use return_ncdhw=False instead.
    y = jnp.transpose(y_blocked, (0, 1, 4, 2, 5, 3, 6))   # (N,Cout,D,kd,H,kh,W)
    return y.reshape(n, cout, 2 * d, 2 * h, w)


def _reference(x, weight, bias, gamma, beta):
    """Pure-JAX reference (no Pallas) of the same module semantics."""
    n, cin, d, h, w = x.shape
    cout = weight.shape[1]
    x32 = x.astype(jnp.float32)
    w32 = weight.astype(jnp.float32)
    y = jnp.einsum("ncdhw,ckab->nkdahbw", x32, w32[:, :, :, :, 0])
    y = y.reshape(n, cout, 2 * d, 2 * h, w) + bias[None, :, None, None, None]
    g = cout // 4
    yg = y.reshape(n, g, 4, 2 * d, 2 * h, w)
    mean = yg.mean(axis=(2, 3, 4, 5), keepdims=True)
    var = ((yg - mean) ** 2).mean(axis=(2, 3, 4, 5), keepdims=True)
    yn = (yg - mean) / jnp.sqrt(var + EPS)
    yn = yn.reshape(n, cout, 2 * d, 2 * h, w)
    yn = yn * gamma[None, :, None, None, None] + beta[None, :, None, None, None]
    return jnp.maximum(yn, 0.0)


if __name__ == "__main__":
    key = jax.random.PRNGKey(0)
    k_x, k_w, k_b, k_g, k_be = jax.random.split(key, 5)

    N, Cin, Cout = 2, 4, 8
    D, H, W = 4, 4, 8            # M = D*H*W = 128 -> lane-dense (multiple of 128)

    x = jax.random.normal(k_x, (N, Cin, D, H, W), dtype=jnp.float32)

    # Module init: kaiming-normal-like weight, zero conv bias, GN weight=1/bias=0.
    fan_in = Cout * 2 * 2 * 1
    weight = jax.random.normal(k_w, (Cin, Cout, 2, 2, 1), jnp.float32) * jnp.sqrt(2.0 / fan_in)
    bias = jnp.zeros((Cout,), jnp.float32)
    gamma = jnp.ones((Cout,), jnp.float32)
    beta = jnp.zeros((Cout,), jnp.float32)

    # 1) Fused whole-sample path, M a multiple of 128 (lane-dense stores).
    out = jax.block_until_ready(deconv_block_forward(x, weight, bias, gamma, beta))
    ref = _reference(x, weight, bias, gamma, beta)
    assert out.shape == (N, Cout, 2 * D, 2 * H, W), out.shape
    assert jnp.allclose(out, ref, atol=2e-4, rtol=2e-4), float(jnp.max(jnp.abs(out - ref)))

    # 2) Non-trivial trained params + ragged M (exercises the 128-padding path
    #    and the in-kernel bias/gamma/beta folding).
    bias2 = 0.3 * jax.random.normal(k_b, (Cout,), jnp.float32)
    gamma2 = 1.0 + 0.2 * jax.random.normal(k_g, (Cout,), jnp.float32)
    beta2 = 0.1 * jax.random.normal(k_be, (Cout,), jnp.float32)
    x2 = jax.random.normal(k_x, (N, Cin, 4, 4, 3), dtype=jnp.float32)   # M = 48
    out2 = jax.block_until_ready(deconv_block_forward(x2, weight, bias2, gamma2, beta2))
    ref2 = _reference(x2, weight, bias2, gamma2, beta2)
    assert jnp.allclose(out2, ref2, atol=2e-4, rtol=2e-4), float(jnp.max(jnp.abs(out2 - ref2)))

    # 3) M-tiled path (the v7x / large-spatial route): stats from the Cin x Cin
    #    Gram of x, single HBM pass over the output.
    out3 = jax.block_until_ready(
        deconv_block_forward(x, weight, bias2, gamma2, beta2, force_tiled=True))
    ref3 = _reference(x, weight, bias2, gamma2, beta2)
    assert jnp.allclose(out3, ref3, atol=5e-4, rtol=5e-4), float(jnp.max(jnp.abs(out3 - ref3)))

    # 4) bf16 I/O path (halves HBM bytes on this HBM-bound op; math stays f32).
    out4 = jax.block_until_ready(
        deconv_block_forward(x.astype(jnp.bfloat16), weight, bias2, gamma2, beta2))
    assert out4.dtype == jnp.bfloat16
    assert jnp.allclose(out4.astype(jnp.float32), ref3, atol=1e-1, rtol=1e-1), \
        float(jnp.max(jnp.abs(out4.astype(jnp.float32) - ref3)))

    print("KERNEL_OK")
</pallas_src>

<mosaic_0001>
module attributes {stable_mosaic.version = 11 : i64} {
  func.func @_fused_kernel(%arg0: i32, %arg1: memref<1x4x128xf32, #tpu.memory_space<vmem>>, %arg2: memref<32x4xf32, #tpu.memory_space<vmem>>, %arg3: memref<32x1xf32, #tpu.memory_space<vmem>>, %arg4: memref<32x1xf32, #tpu.memory_space<vmem>>, %arg5: memref<32x1xf32, #tpu.memory_space<vmem>>, %arg6: memref<32x32xf32, #tpu.memory_space<vmem>>, %arg7: memref<1x32x128xf32, #tpu.memory_space<vmem>>) attributes {dimension_semantics = [#tpu.dimension_semantics<parallel>], iteration_bounds = array<i64: 2>, scalar_prefetch = 0 : i64, scratch_operands = 0 : i64, tpu.core_type = #tpu.core_type<tc>, window_params = [{transform_indices = @transform_0, window_bounds = array<i64: 1, 4, 128>}, {pipeline_mode = #tpu.pipeline_mode<synchronous>, transform_indices = @transform_1, window_bounds = array<i64: 32, 4>}, {pipeline_mode = #tpu.pipeline_mode<synchronous>, transform_indices = @transform_2, window_bounds = array<i64: 32, 1>}, {pipeline_mode = #tpu.pipeline_mode<synchronous>, transform_indices = @transform_3, window_bounds = array<i64: 32, 1>}, {pipeline_mode = #tpu.pipeline_mode<synchronous>, transform_indices = @transform_4, window_bounds = array<i64: 32, 1>}, {pipeline_mode = #tpu.pipeline_mode<synchronous>, transform_indices = @transform_5, window_bounds = array<i64: 32, 32>}, {transform_indices = @transform_6, window_bounds = array<i64: 1, 32, 128>}]} {
    %c0 = arith.constant 0 : index
    %c0_0 = arith.constant 0 : index
    %c0_1 = arith.constant 0 : index
    %0 = vector.load %arg1[%c0, %c0_0, %c0_1] : memref<1x4x128xf32, #tpu.memory_space<vmem>>, vector<1x4x128xf32>
    %1 = vector.shape_cast %0 : vector<1x4x128xf32> to vector<4x128xf32>
    %c0_2 = arith.constant 0 : index
    %c0_3 = arith.constant 0 : index
    %2 = vector.load %arg2[%c0_2, %c0_3] : memref<32x4xf32, #tpu.memory_space<vmem>>, vector<32x4xf32>
    %cst = arith.constant dense<0.000000e+00> : vector<32x128xf32>
    %3 = tpu.matmul %2, %1, %cst {dimension_numbers = #tpu.dot_dimension_numbers<[1], [0], [0], [1], [0, 0, 1, 1], [], []>} : vector<32x4xf32>, vector<4x128xf32>, vector<32x128xf32> -> vector<32x128xf32>
    %c0_4 = arith.constant 0 : index
    %c0_5 = arith.constant 0 : index
    %4 = vector.load %arg3[%c0_4, %c0_5] : memref<32x1xf32, #tpu.memory_space<vmem>>, vector<32x1xf32>
    %cst_6 = arith.constant dense<0.000000e+00> : vector<32xf32>
    %5 = vector.multi_reduction <add>, %3, %cst_6 [1] : vector<32x128xf32> to vector<32xf32>
    %6 = vector.shape_cast %5 : vector<32xf32> to vector<32x1xf32>
    %7 = arith.mulf %3, %3 : vector<32x128xf32>
    %cst_7 = arith.constant dense<0.000000e+00> : vector<32xf32>
    %8 = vector.multi_reduction <add>, %7, %cst_7 [1] : vector<32x128xf32> to vector<32xf32>
    %9 = vector.shape_cast %8 : vector<32xf32> to vector<32x1xf32>
    %cst_8 = arith.constant 1.280000e+02 : f32
    %10 = vector.broadcast %cst_8 : f32 to vector<32x1xf32>
    %11 = arith.mulf %10, %4 : vector<32x1xf32>
    %12 = arith.addf %6, %11 : vector<32x1xf32>
    %cst_9 = arith.constant 2.000000e+00 : f32
    %13 = vector.broadcast %cst_9 : f32 to vector<32x1xf32>
    %14 = arith.mulf %13, %4 : vector<32x1xf32>
    %15 = arith.mulf %14, %6 : vector<32x1xf32>
    %16 = arith.addf %9, %15 : vector<32x1xf32>
    %17 = arith.mulf %4, %4 : vector<32x1xf32>
    %cst_10 = arith.constant 1.280000e+02 : f32
    %18 = vector.broadcast %cst_10 : f32 to vector<32x1xf32>
    %19 = arith.mulf %18, %17 : vector<32x1xf32>
    %20 = arith.addf %16, %19 : vector<32x1xf32>
    %c0_11 = arith.constant 0 : index
    %c0_12 = arith.constant 0 : index
    %21 = vector.load %arg6[%c0_11, %c0_12] : memref<32x32xf32, #tpu.memory_space<vmem>>, vector<32x32xf32>
    %cst_13 = arith.constant dense<0.000000e+00> : vector<32x1xf32>
    %22 = tpu.matmul %21, %12, %cst_13 {dimension_numbers = #tpu.dot_dimension_numbers<[1], [0], [0], [1], [0, 0, 1, 1], [], []>} : vector<32x32xf32>, vector<32x1xf32>, vector<32x1xf32> -> vector<32x1xf32>
    %c0_14 = arith.constant 0 : index
    %c0_15 = arith.constant 0 : index
    %23 = vector.load %arg6[%c0_14, %c0_15] : memref<32x32xf32, #tpu.memory_space<vmem>>, vector<32x32xf32>
    %cst_16 = arith.constant dense<0.000000e+00> : vector<32x1xf32>
    %24 = tpu.matmul %23, %20, %cst_16 {dimension_numbers = #tpu.dot_dimension_numbers<[1], [0], [0], [1], [0, 0, 1, 1], [], []>} : vector<32x32xf32>, vector<32x1xf32>, vector<32x1xf32> -> vector<32x1xf32>
    %25 = arith.mulf %22, %22 : vector<32x1xf32>
    %26 = arith.subf %24, %25 : vector<32x1xf32>
    %cst_17 = arith.constant 0.000000e+00 : f32
    %27 = vector.broadcast %cst_17 : f32 to vector<32x1xf32>
    %28 = arith.maximumf %26, %27 : vector<32x1xf32>
    %cst_18 = arith.constant 9.99999974E-6 : f32
    %29 = vector.broadcast %cst_18 : f32 to vector<32x1xf32>
    %30 = arith.addf %28, %29 : vector<32x1xf32>
    %31 = math.rsqrt %30 : vector<32x1xf32>
    %c0_19 = arith.constant 0 : index
    %c0_20 = arith.constant 0 : index
    %32 = vector.load %arg4[%c0_19, %c0_20] : memref<32x1xf32, #tpu.memory_space<vmem>>, vector<32x1xf32>
    %33 = arith.mulf %32, %31 : vector<32x1xf32>
    %34 = arith.subf %4, %22 : vector<32x1xf32>
    %35 = arith.mulf %34, %33 : vector<32x1xf32>
    %c0_21 = arith.constant 0 : index
    %c0_22 = arith.constant 0 : index
    %36 = vector.load %arg5[%c0_21, %c0_22] : memref<32x1xf32, #tpu.memory_space<vmem>>, vector<32x1xf32>
    %37 = arith.addf %35, %36 : vector<32x1xf32>
    %38 = vector.broadcast %33 : vector<32x1xf32> to vector<32x128xf32>
    %39 = arith.mulf %3, %38 : vector<32x128xf32>
    %40 = vector.broadcast %37 : vector<32x1xf32> to vector<32x128xf32>
    %41 = arith.addf %39, %40 : vector<32x128xf32>
    %cst_23 = arith.constant 0.000000e+00 : f32
    %42 = vector.broadcast %cst_23 : f32 to vector<32x128xf32>
    %43 = arith.maximumf %41, %42 : vector<32x128xf32>
    %c0_24 = arith.constant 0 : index
    %c0_25 = arith.constant 0 : index
    %c0_26 = arith.constant 0 : index
    %44 = vector.load %arg7[%c0_24, %c0_25, %c0_26] : memref<1x32x128xf32, #tpu.memory_space<vmem>>, vector<1x32x128xf32>
    %45 = vector.shape_cast %44 : vector<1x32x128xf32> to vector<32x128xf32>
    %46 = vector.shape_cast %43 : vector<32x128xf32> to vector<1x32x128xf32>
    tpu.vector_store %arg7[%c0_24, %c0_25, %c0_26], %46 {strides = array<i32>} : memref<1x32x128xf32, #tpu.memory_space<vmem>>, vector<1x32x128xf32>,
    return
  }
  func.func @transform_0(%arg0: i32) -> (i32, i32, i32) {
    %c0_i32 = arith.constant 0 : i32
    %c0_i32_0 = arith.constant 0 : i32
    %c0_i32_1 = arith.constant 0 : i32
    return %arg0, %c0_i32, %c0_i32_0 : i32, i32, i32
  }
  func.func @transform_1(%arg0: i32) -> (i32, i32) {
    %c0_i32 = arith.constant 0 : i32
    %c0_i32_0 = arith.constant 0 : i32
    %c0_i32_1 = arith.constant 0 : i32
    return %c0_i32, %c0_i32_0 : i32, i32
  }
  func.func @transform_2(%arg0: i32) -> (i32, i32) {
    %c0_i32 = arith.constant 0 : i32
    %c0_i32_0 = arith.constant 0 : i32
    %c0_i32_1 = arith.constant 0 : i32
    return %c0_i32, %c0_i32_0 : i32, i32
  }
  func.func @transform_3(%arg0: i32) -> (i32, i32) {
    %c0_i32 = arith.constant 0 : i32
    %c0_i32_0 = arith.constant 0 : i32
    %c0_i32_1 = arith.constant 0 : i32
    return %c0_i32, %c0_i32_0 : i32, i32
  }
  func.func @transform_4(%arg0: i32) -> (i32, i32) {
    %c0_i32 = arith.constant 0 : i32
    %c0_i32_0 = arith.constant 0 : i32
    %c0_i32_1 = arith.constant 0 : i32
    return %c0_i32, %c0_i32_0 : i32, i32
  }
  func.func @transform_5(%arg0: i32) -> (i32, i32) {
    %c0_i32 = arith.constant 0 : i32
    %c0_i32_0 = arith.constant 0 : i32
    %c0_i32_1 = arith.constant 0 : i32
    return %c0_i32, %c0_i32_0 : i32, i32
  }
  func.func @transform_6(%arg0: i32) -> (i32, i32, i32) {
    %c0_i32 = arith.constant 0 : i32
    %c0_i32_0 = arith.constant 0 : i32
    %c0_i32_1 = arith.constant 0 : i32
    return %arg0, %c0_i32, %c0_i32_0 : i32, i32, i32
  }
}

</mosaic_0001>

<llo_original>
// kernel: tpu_custom_call.1
$region0: #{tpu_custom_call.1}
  #allocation0 [shape = 'u32[]', space=smem, size = 0x4, offset = 0x4, fixed_abs, tag = 'smem constant byte address 0x4 - core index']
  #allocation1 [shape = 'u32[72,128]{1,0:T(1,128)}', space=vmem, size = 0x9000, scoped, tag = 'internal scratch']
  %s0 = inlined_call_operand.vmem [shape: f32[2,4,128], index: 0, kind: input, shape index: {}]
  %s1 = inlined_call_operand.vmem [shape: f32[32,4], index: 1, kind: input, shape index: {}]
  %s2 = inlined_call_operand.vmem [shape: f32[32,1], index: 2, kind: input, shape index: {}]
  %s3 = inlined_call_operand.vmem [shape: f32[32,1], index: 3, kind: input, shape index: {}]
  %s4 = inlined_call_operand.vmem [shape: f32[32,1], index: 4, kind: input, shape index: {}]
  %s5 = inlined_call_operand.vmem [shape: f32[32,32], index: 5, kind: input, shape index: {}]
  %s6 = inlined_call_operand.hbm [shape: f32[2,32,128], index: 6, kind: output, shape index: {}]
  %s7 = sld [smem:[#allocation0]]
  $region57: #{tpu_custom_call.1} parent=0
    _
  %s9 = ssub.s32 1, %s7
  %s10 = scalar_select 0, %s9, %s7
  $region1: #{tpu_custom_call.1} parent=0
    #allocation2 [shape = 'u8[32768]{0}', space=vmem, size = 0x8000, scoped, tag = 'output window, operand 0']
    #allocation3 [shape = 's32[2]{0}', space=sflag, size = 0x8, scoped, tag = 'scoped memory for tpu_custom_call.1']
    %11 = vsyncpa [#allocation3], 0
    %s12 = scalar_lea.sflag [#allocation3], 1
    %13 = vsyncpa %s12, 0
    loop: start=0, step=1, limit=4
    $region2: #{tpu_custom_call.1} parent=1 // loop_pre_header
      _
    $region3: #{tpu_custom_call.1} parent=1 // loop_header
      %s15 = sphi 0, %s19
      %p16 = scmp.ge.s32.totalorder %s15, 4
      %s25 = sphi 0, %s27
      %s28 = sphi 0, %s25
      %s29 = sphi 0, %s28
      %s45 = sphi 0, %s29
      %s49 = sphi 0, %s49
      %s51 = sphi 0, %s49
      %s52 = sphi 0, %s51
      %s66 = sphi 0, %s52
      %s70 = sphi 0, %s70
      %s72 = sphi 0, %s70
      %s73 = sphi 0, %s72
      %s87 = sphi 0, %s73
      %s91 = sphi 0, %s91
      %s93 = sphi 0, %s91
      %s94 = sphi 0, %s93
      %s108 = sphi 0, %s94
      %s112 = sphi 0, %s112
      %s114 = sphi 0, %s112
      %s115 = sphi 0, %s114
      %s129 = sphi 0, %s115
      %s133 = sphi 0, %s133
      %s135 = sphi 0, %s133
      %s136 = sphi 0, %s135
      %s150 = sphi 0, %s136
      %s156 = sphi 0, %s158
      %s159 = sphi 0, %s156
      %s160 = sphi 0, %s159
      %s176 = sphi 0, %s160
    $region4: #{tpu_custom_call.1} parent=1 // loop_header_branch
      %18 = sbr.rel (%p16) target = $region8
    $region5: #{tpu_custom_call.1} parent=1 // loop_body
      %s20 = ssub.s32 %s15, 1
      %s21 = ssub.s32 %s15, 2
      %s22 = sadd.s32 %s15, 1
      %s23 = ssub.s32 %s15, %s22
      %p24 = scmp.eq.s32.totalorder %s23, 0
      %s26 = sadd.s32 %s25, 1
      %s27 = scalar_select %p24, %s25, %s26
      %p30 = pneg %p24
      %p31 = scmp.eq.s32.totalorder %s15, 1
      %p32 = por %p30, %p31
      %p33 = scmp.ne.s32.totalorder %s25, %s28
      %p34 = scmp.eq.s32.totalorder %s15, 0
      %p35 = por %p33, %p34
      %p36 = scmp.ne.s32.totalorder %s25, %s28
      %p37 = scmp.eq.s32.totalorder %s20, 1
      %p38 = por %p36, %p37
      %p39 = scmp.ne.s32.totalorder %s28, %s29
      %p40 = scmp.eq.s32.totalorder %s20, 0
      %p41 = por %p39, %p40
      %p42 = scmp.ne.s32.totalorder %s28, %s29
      %p43 = scmp.eq.s32.totalorder %s21, 1
      %p44 = por %p42, %p43
      %p46 = scmp.ne.s32.totalorder %s29, %s45
      %p47 = scmp.eq.s32.totalorder %s21, 0
      %p48 = por %p46, %p47
      %s50 = sadd.s32 %s49, 1
      %p53 = scmp.eq.s32.totalorder %s15, 1
      %p54 = scmp.ne.s32.totalorder %s49, %s51
      %p55 = scmp.eq.s32.totalorder %s15, 0
      %p56 = por %p54, %p55
      %p57 = scmp.ne.s32.totalorder %s49, %s51
      %p58 = scmp.eq.s32.totalorder %s20, 1
      %p59 = por %p57, %p58
      %p60 = scmp.ne.s32.totalorder %s51, %s52
      %p61 = scmp.eq.s32.totalorder %s20, 0
      %p62 = por %p60, %p61
      %p63 = scmp.ne.s32.totalorder %s51, %s52
      %p64 = scmp.eq.s32.totalorder %s21, 1
      %p65 = por %p63, %p64
      %p67 = scmp.ne.s32.totalorder %s52, %s66
      %p68 = scmp.eq.s32.totalorder %s21, 0
      %p69 = por %p67, %p68
      %s71 = sadd.s32 %s70, 1
      %p74 = scmp.eq.s32.totalorder %s15, 1
      %p75 = scmp.ne.s32.totalorder %s70, %s72
      %p76 = scmp.eq.s32.totalorder %s15, 0
      %p77 = por %p75, %p76
      %p78 = scmp.ne.s32.totalorder %s70, %s72
      %p79 = scmp.eq.s32.totalorder %s20, 1
      %p80 = por %p78, %p79
      %p81 = scmp.ne.s32.totalorder %s72, %s73
      %p82 = scmp.eq.s32.totalorder %s20, 0
      %p83 = por %p81, %p82
      %p84 = scmp.ne.s32.totalorder %s72, %s73
      %p85 = scmp.eq.s32.totalorder %s21, 1
      %p86 = por %p84, %p85
      %p88 = scmp.ne.s32.totalorder %s73, %s87
      %p89 = scmp.eq.s32.totalorder %s21, 0
      %p90 = por %p88, %p89
      %s92 = sadd.s32 %s91, 1
      %p95 = scmp.eq.s32.totalorder %s15, 1
      %p96 = scmp.ne.s32.totalorder %s91, %s93
      %p97 = scmp.eq.s32.totalorder %s15, 0
      %p98 = por %p96, %p97
      %p99 = scmp.ne.s32.totalorder %s91, %s93
      %p100 = scmp.eq.s32.totalorder %s20, 1
      %p101 = por %p99, %p100
      %p102 = scmp.ne.s32.totalorder %s93, %s94
      %p103 = scmp.eq.s32.totalorder %s20, 0
      %p104 = por %p102, %p103
      %p105 = scmp.ne.s32.totalorder %s93, %s94
      %p106 = scmp.eq.s32.totalorder %s21, 1
      %p107 = por %p105, %p106
      %p109 = scmp.ne.s32.totalorder %s94, %s108
      %p110 = scmp.eq.s32.totalorder %s21, 0
      %p111 = por %p109, %p110
      %s113 = sadd.s32 %s112, 1
      %p116 = scmp.eq.s32.totalorder %s15, 1
      %p117 = scmp.ne.s32.totalorder %s112, %s114
      %p118 = scmp.eq.s32.totalorder %s15, 0
      %p119 = por %p117, %p118
      %p120 = scmp.ne.s32.totalorder %s112, %s114
      %p121 = scmp.eq.s32.totalorder %s20, 1
      %p122 = por %p120, %p121
      %p123 = scmp.ne.s32.totalorder %s114, %s115
      %p124 = scmp.eq.s32.totalorder %s20, 0
      %p125 = por %p123, %p124
      %p126 = scmp.ne.s32.totalorder %s114, %s115
      %p127 = scmp.eq.s32.totalorder %s21, 1
      %p128 = por %p126, %p127
      %p130 = scmp.ne.s32.totalorder %s115, %s129
      %p131 = scmp.eq.s32.totalorder %s21, 0
      %p132 = por %p130, %p131
      %s134 = sadd.s32 %s133, 1
      %p137 = scmp.eq.s32.totalorder %s15, 1
      %p138 = scmp.ne.s32.totalorder %s133, %s135
      %p139 = scmp.eq.s32.totalorder %s15, 0
      %p140 = por %p138, %p139
      %p141 = scmp.ne.s32.totalorder %s133, %s135
      %p142 = scmp.eq.s32.totalorder %s20, 1
      %p143 = por %p141, %p142
      %p144 = scmp.ne.s32.totalorder %s135, %s136
      %p145 = scmp.eq.s32.totalorder %s20, 0
      %p146 = por %p144, %p145
      %p147 = scmp.ne.s32.totalorder %s135, %s136
      %p148 = scmp.eq.s32.totalorder %s21, 1
      %p149 = por %p147, %p148
      %p151 = scmp.ne.s32.totalorder %s136, %s150
      %p152 = scmp.eq.s32.totalorder %s21, 0
      %p153 = por %p151, %p152
      %s154 = ssub.s32 %s15, %s22
      %p155 = scmp.eq.s32.totalorder %s154, 0
      %s157 = sadd.s32 %s156, 1
      %s158 = scalar_select %p155, %s156, %s157
      %p161 = pneg %p155
      %p162 = scmp.eq.s32.totalorder %s15, 1
      %p163 = por %p161, %p162
      %p164 = scmp.ne.s32.totalorder %s156, %s159
      %p165 = scmp.eq.s32.totalorder %s15, 0
      %p166 = por %p164, %p165
      %p167 = scmp.ne.s32.totalorder %s156, %s159
      %p168 = scmp.eq.s32.totalorder %s20, 1
      %p169 = por %p167, %p168
      %p170 = scmp.ne.s32.totalorder %s159, %s160
      %p171 = scmp.eq.s32.totalorder %s20, 0
      %p172 = por %p170, %p171
      %p173 = scmp.ne.s32.totalorder %s159, %s160
      %p174 = scmp.eq.s32.totalorder %s21, 1
      %p175 = por %p173, %p174
      %p177 = scmp.ne.s32.totalorder %s160, %s176
      %p178 = scmp.eq.s32.totalorder %s21, 0
      %p179 = por %p177, %p178
      %p180 = scmp.le.s32.totalorder 1, %s15
      %p181 = scmp.lt.s32.totalorder %s15, 3
      %p182 = pnand %p180, %p181
      %p183 = pneg %p182
      // Predicated region
      $region9: #{tpu_custom_call.1} parent=5 // pred_check
        _
      $region10: #{tpu_custom_call.1} parent=5 // pred_check_branch
        %185 = sbr.rel (%p182) target = $region12
      $region11: #{tpu_custom_call.1} parent=5 // pred_region
        %s186 = ssub.s32 %s15, 1
        // Predicated region
        $region13: #{tpu_custom_call.1} parent=11 // pred_check
          %p187 = pneg %p62
        $region14: #{tpu_custom_call.1} parent=11 // pred_check_branch
          %189 = sbr.rel (%p187) target = $region16
        $region15: #{tpu_custom_call.1} parent=11 // pred_region
          _
        $region16: #{tpu_custom_call.1} parent=11 // pred_fallthru
          _
        // Predicated region
        $region17: #{tpu_custom_call.1} parent=11 // pred_check
          %p190 = pneg %p83
        $region18: #{tpu_custom_call.1} parent=11 // pred_check_branch
          %192 = sbr.rel (%p190) target = $region20
        $region19: #{tpu_custom_call.1} parent=11 // pred_region
          _
        $region20: #{tpu_custom_call.1} parent=11 // pred_fallthru
          _
        // Predicated region
        $region21: #{tpu_custom_call.1} parent=11 // pred_check
          %p193 = pneg %p104
        $region22: #{tpu_custom_call.1} parent=11 // pred_check_branch
          %195 = sbr.rel (%p193) target = $region24
        $region23: #{tpu_custom_call.1} parent=11 // pred_region
          _
        $region24: #{tpu_custom_call.1} parent=11 // pred_fallthru
          _
        // Predicated region
        $region25: #{tpu_custom_call.1} parent=11 // pred_check
          %p196 = pneg %p125
        $region26: #{tpu_custom_call.1} parent=11 // pred_check_branch
          %198 = sbr.rel (%p196) target = $region28
        $region27: #{tpu_custom_call.1} parent=11 // pred_region
          _
        $region28: #{tpu_custom_call.1} parent=11 // pred_fallthru
          _
        // Predicated region
        $region29: #{tpu_custom_call.1} parent=11 // pred_check
          %p199 = pneg %p146
        $region30: #{tpu_custom_call.1} parent=11 // pred_check_branch
          %201 = sbr.rel (%p199) target = $region32
        $region31: #{tpu_custom_call.1} parent=11 // pred_region
          _
        $region32: #{tpu_custom_call.1} parent=11 // pred_fallthru
          _
      $region12: #{tpu_custom_call.1} parent=5 // pred_fallthru
        _
      %p202 = scmp.lt.s32.totalorder %s15, 2
      // Predicated region
      $region33: #{tpu_custom_call.1} parent=5 // pred_check
        %p203 = pneg %p202
      $region34: #{tpu_custom_call.1} parent=5 // pred_check_branch
        %205 = sbr.rel (%p203) target = $region36
      $region35: #{tpu_custom_call.1} parent=5 // pred_region
        // Predicated region
        $region37: #{tpu_custom_call.1} parent=35 // pred_check
          %p206 = pneg %p35
        $region38: #{tpu_custom_call.1} parent=35 // pred_check_branch
          %208 = sbr.rel (%p206) target = $region40
        $region39: #{tpu_custom_call.1} parent=35 // pred_region
          %p209 = scmp.lt.s32.totalorder %s15, 1
          %s210 = scalar_select %p209, %s15, 1
          %s211 = smul.addr %s210, 4
          %s212 = scalar_lea.vmem %s0, %s211
        $region40: #{tpu_custom_call.1} parent=35 // pred_fallthru
          _
      $region36: #{tpu_custom_call.1} parent=5 // pred_fallthru
        _
      %p213 = scmp.le.s32.totalorder 1, %s15
      %p214 = scmp.lt.s32.totalorder %s15, 3
      %p215 = pnand %p213, %p214
      %p216 = pneg %p215
      // Predicated region
      $region41: #{tpu_custom_call.1} parent=5 // pred_check
        _
      $region42: #{tpu_custom_call.1} parent=5 // pred_check_branch
        %218 = sbr.rel (%p215) target = $region44
      $region43: #{tpu_custom_call.1} parent=5 // pred_region
        %s219 = ssub.s32 %s15, 1
        %p220 = scmp.lt.s32.totalorder %s20, 1
        %s221 = scalar_select %p220, %s20, 1
        %s222 = smul.addr %s221, 4
        %s223 = scalar_lea.vmem %s0, %s222
        %p224 = pneg %p41
        %p225 = pneg %p38
        %p226 = pneg %p62
        %p227 = pneg %p59
        %p228 = pneg %p83
        %p229 = pneg %p80
        %p230 = pneg %p104
        %p231 = pneg %p101
        %p232 = pneg %p125
        %p233 = pneg %p122
        %p234 = pneg %p146
        %p235 = pneg %p143
        %p236 = pneg %p172
        %p237 = pneg %p169
        %s238 = sand.u32 %s159, 1
        %s239 = scalar_lea.sflag [#allocation3], %s238
        %s240 = sand.u32 %s159, 1
        %s241 = smul.addr %s240, 32
        %s242 = scalar_lea.vmem [#allocation2], %s241
        %p243 = scmp.lt.s32.totalorder %s20, 1
        %s244 = scalar_select %p243, %s20, 1
        %s245 = smul.addr %s244, 4
        %s246 = scalar_lea.vmem %s0, %s245
        %v247 = vld [vmem:[%s246] sm:$0xf]
        %v248 = vld [vmem:[%s1] sm:$0xff]
        %v249 = vld [vmem:[%s1 + $0x8] sm:$0xff]
        %v250 = vld [vmem:[%s1 + $0x10] sm:$0xff]
        %v251 = vld [vmem:[%s1 + $0x18] sm:$0xff]
        %vm252 = vcmask 31744
        %v254 = vsel %vm252, %v248, 0
        %v257 = vsel %vm252, %v249, 0
        %v260 = vsel %vm252, %v250, 0
        %v263 = vsel %vm252, %v251, 0
        %vm265 = vcmask 1043456
        %v267 = vsel %vm265, %v247, 0
        %269 = vmatpush.msra.mxu0 0.0
        %270 = vmatpush.msra.mxu0 0.0
        %271 = vmatpush.msra.mxu0 0.0
        %272 = vmatpush.msra.mxu0 0.0
        %273 = vmatpush.msra.mxu0 0.0
        %274 = vmatpush.msra.mxu0 0.0
        %275 = vmatpush.msra.mxu0 0.0
        %276 = vmatpush.msra.mxu0 0.0
        %277 = vmatpush.msra.mxu0 0.0
        %278 = vmatpush.msra.mxu0 0.0
        %279 = vmatpush.msra.mxu0 0.0
        %280 = vmatpush.msra.mxu0 0.0
        %281 = vmatpush.msra.mxu0 0.0
        %282 = vmatpush.msra.mxu0 0.0
        %283 = vmatpush.msra.mxu0 0.0
        %284 = vmatpush.msra.mxu0 %v267
        %285 = vmatmul.f32.gmra.mxu0 %v254
        %v286 = vpop.f32.mrf.mxu0
        %v287 = vadd.f32 0.0, %v286
        %288 = vmatmul.f32.gmra.mxu0 %v257
        %v289 = vpop.f32.mrf.mxu0
        %v290 = vadd.f32 0.0, %v289
        %291 = vmatmul.f32.gmra.mxu0 %v260
        %v292 = vpop.f32.mrf.mxu0
        %v293 = vadd.f32 0.0, %v292
        %294 = vmatmul.f32.gmra.mxu0 %v263
        %v295 = vpop.f32.mrf.mxu0
        %v296 = vadd.f32 0.0, %v295
        %297 = vdwg.mxu0
        %v298 = vld [vmem:[%s2] sm:$0xff]
        %v299 = vld [vmem:[%s2 + $0x8] sm:$0xff]
        %v300 = vld [vmem:[%s2 + $0x10] sm:$0xff]
        %v301 = vld [vmem:[%s2 + $0x18] sm:$0xff]
        %302 = vadd.xlane.f32.xlu0 %v287
        %v303 = vpop.xlane.xlu0 %302
        %304 = vadd.xlane.f32.xlu0 %v290
        %v305 = vpop.xlane.xlu0 %304
        %306 = vadd.xlane.f32.xlu0 %v293
        %v307 = vpop.xlane.xlu0 %306
        %308 = vadd.xlane.f32.xlu0 %v296
        %v309 = vpop.xlane.xlu0 %308
        %v310 = vmul.f32 %v287, %v287
        %v311 = vmul.f32 %v290, %v290
        %v312 = vmul.f32 %v293, %v293
        %v313 = vmul.f32 %v296, %v296
        %314 = vadd.xlane.f32.xlu0 %v310
        %v315 = vpop.xlane.xlu0 %314
        %316 = vadd.xlane.f32.xlu0 %v311
        %v317 = vpop.xlane.xlu0 %316
        %318 = vadd.xlane.f32.xlu0 %v312
        %v319 = vpop.xlane.xlu0 %318
        %320 = vadd.xlane.f32.xlu0 %v313
        %v321 = vpop.xlane.xlu0 %320
        %v322 = vmul.f32 %v298, 128.0
        %v323 = vmul.f32 %v299, 128.0
        %v324 = vmul.f32 %v300, 128.0
        %v325 = vmul.f32 %v301, 128.0
        %v326 = vadd.f32 %v303, %v322
        %v327 = vadd.f32 %v305, %v323
        %v328 = vadd.f32 %v307, %v324
        %v329 = vadd.f32 %v309, %v325
        %v330 = vmul.f32 %v298, 2.0
        %v331 = vmul.f32 %v299, 2.0
        %v332 = vmul.f32 %v300, 2.0
        %v333 = vmul.f32 %v301, 2.0
        %v334 = vmul.f32 %v330, %v303
        %v335 = vmul.f32 %v331, %v305
        %v336 = vmul.f32 %v332, %v307
        %v337 = vmul.f32 %v333, %v309
        %v338 = vadd.f32 %v315, %v334
        %v339 = vadd.f32 %v317, %v335
        %v340 = vadd.f32 %v319, %v336
        %v341 = vadd.f32 %v321, %v337
        %v342 = vmul.f32 %v298, %v298
        %v343 = vmul.f32 %v299, %v299
        %v344 = vmul.f32 %v300, %v300
        %v345 = vmul.f32 %v301, %v301
        %v346 = vmul.f32 %v342, 128.0
        %v347 = vmul.f32 %v343, 128.0
        %v348 = vmul.f32 %v344, 128.0
        %v349 = vmul.f32 %v345, 128.0
        %v350 = vadd.f32 %v338, %v346
        %v351 = vadd.f32 %v339, %v347
        %v352 = vadd.f32 %v340, %v348
        %v353 = vadd.f32 %v341, %v349
        %v354 = vld [vmem:[%s5] sm:$0xff]
        %v355 = vld [vmem:[%s5 + $0x8] sm:$0xff]
        %v356 = vld [vmem:[%s5 + $0x10] sm:$0xff]
        %v357 = vld [vmem:[%s5 + $0x18] sm:$0xff]
        %vm358 = vcmask 261120
        %v360 = vsel %vm358, %v354, 0
        %v363 = vsel %vm358, %v355, 0
        %v366 = vsel %vm358, %v356, 0
        %v369 = vsel %vm358, %v357, 0
        %371 = vmatpush.msra.mxu0 0.0
        %372 = vmatpush.msra.mxu0 0.0
        %373 = vmatpush.msra.mxu0 0.0
        %374 = vmatpush.msra.mxu0 0.0
        %375 = vmatpush.msra.mxu0 0.0
        %376 = vmatpush.msra.mxu0 0.0
        %377 = vmatpush.msra.mxu0 0.0
        %378 = vmatpush.msra.mxu0 0.0
        %379 = vmatpush.msra.mxu0 0.0
        %380 = vmatpush.msra.mxu0 0.0
        %381 = vmatpush.msra.mxu0 0.0
        %382 = vmatpush.msra.mxu0 0.0
        %383 = vmatpush.msra.mxu0 %v329
        %384 = vmatpush.msra.mxu0 %v328
        %385 = vmatpush.msra.mxu0 %v327
        %386 = vmatpush.msra.mxu0 %v326
        %387 = vmatmul.f32.gmra.mxu0 %v360
        %v388 = vpop.f32.mrf.mxu0
        %v389 = vadd.f32 0.0, %v388
        %390 = vmatmul.f32.gmra.mxu0 %v363
        %v391 = vpop.f32.mrf.mxu0
        %v392 = vadd.f32 0.0, %v391
        %393 = vmatmul.f32.gmra.mxu0 %v366
        %v394 = vpop.f32.mrf.mxu0
        %v395 = vadd.f32 0.0, %v394
        %396 = vmatmul.f32.gmra.mxu0 %v369
        %v397 = vpop.f32.mrf.mxu0
        %v398 = vadd.f32 0.0, %v397
        %399 = vdwg.mxu0
        %400 = vmatpush.msra.mxu0 0.0
        %401 = vmatpush.msra.mxu0 0.0
        %402 = vmatpush.msra.mxu0 0.0
        %403 = vmatpush.msra.mxu0 0.0
        %404 = vmatpush.msra.mxu0 0.0
        %405 = vmatpush.msra.mxu0 0.0
        %406 = vmatpush.msra.mxu0 0.0
        %407 = vmatpush.msra.mxu0 0.0
        %408 = vmatpush.msra.mxu0 0.0
        %409 = vmatpush.msra.mxu0 0.0
        %410 = vmatpush.msra.mxu0 0.0
        %411 = vmatpush.msra.mxu0 0.0
        %412 = vmatpush.msra.mxu0 %v353
        %413 = vmatpush.msra.mxu0 %v352
        %414 = vmatpush.msra.mxu0 %v351
        %415 = vmatpush.msra.mxu0 %v350
        %416 = vmatmul.f32.gmra.mxu0 %v360
        %v417 = vpop.f32.mrf.mxu0
        %v418 = vadd.f32 0.0, %v417
        %419 = vmatmul.f32.gmra.mxu0 %v363
        %v420 = vpop.f32.mrf.mxu0
        %v421 = vadd.f32 0.0, %v420
        %422 = vmatmul.f32.gmra.mxu0 %v366
        %v423 = vpop.f32.mrf.mxu0
        %v424 = vadd.f32 0.0, %v423
        %425 = vmatmul.f32.gmra.mxu0 %v369
        %v426 = vpop.f32.mrf.mxu0
        %v427 = vadd.f32 0.0, %v426
        %428 = vdwg.mxu0
        %v429 = vmul.f32 %v389, %v389
        %v430 = vmul.f32 %v392, %v392
        %v431 = vmul.f32 %v395, %v395
        %v432 = vmul.f32 %v398, %v398
        %v433 = vsub.f32 %v418, %v429
        %v434 = vsub.f32 %v421, %v430
        %v435 = vsub.f32 %v424, %v431
        %v436 = vsub.f32 %v427, %v432
        %v437 = vmax.f32 %v433, 0.0
        %v438 = vmax.f32 %v434, 0.0
        %v439 = vmax.f32 %v435, 0.0
        %v440 = vmax.f32 %v436, 0.0
        %v441 = vadd.f32 %v437, 1e-05
        %v442 = vadd.f32 %v438, 1e-05
        %v443 = vadd.f32 %v439, 1e-05
        %v444 = vadd.f32 %v440, 1e-05
        %v445 = vrsqrt.pop %v441
        %v446 = vmul.f32 %v445, %v441
        %v447 = vmul.f32 %v446, %v445
        %v448 = vmul.f32 0.5, %v447
        %v449 = vsub.f32 1.5, %v448
        %v450 = vmul.f32 %v445, %v449
        %vm451 = vweird.f32 %v441
        %vm452 = vweird.f32 %v445
        %vm453 = vmor %vm451, %vm452
        %v454 = vsel %vm453, %v445, %v450
        %v455 = vrsqrt.pop %v442
        %v456 = vmul.f32 %v455, %v442
        %v457 = vmul.f32 %v456, %v455
        %v458 = vmul.f32 0.5, %v457
        %v459 = vsub.f32 1.5, %v458
        %v460 = vmul.f32 %v455, %v459
        %vm461 = vweird.f32 %v442
        %vm462 = vweird.f32 %v455
        %vm463 = vmor %vm461, %vm462
        %v464 = vsel %vm463, %v455, %v460
        %v465 = vrsqrt.pop %v443
        %v466 = vmul.f32 %v465, %v443
        %v467 = vmul.f32 %v466, %v465
        %v468 = vmul.f32 0.5, %v467
        %v469 = vsub.f32 1.5, %v468
        %v470 = vmul.f32 %v465, %v469
        %vm471 = vweird.f32 %v443
        %vm472 = vweird.f32 %v465
        %vm473 = vmor %vm471, %vm472
        %v474 = vsel %vm473, %v465, %v470
        %v475 = vrsqrt.pop %v444
        %v476 = vmul.f32 %v475, %v444
        %v477 = vmul.f32 %v476, %v475
        %v478 = vmul.f32 0.5, %v477
        %v479 = vsub.f32 1.5, %v478
        %v480 = vmul.f32 %v475, %v479
        %vm481 = vweird.f32 %v444
        %vm482 = vweird.f32 %v475
        %vm483 = vmor %vm481, %vm482
        %v484 = vsel %vm483, %v475, %v480
        %v485 = vld [vmem:[%s3] sm:$0xff]
        %v486 = vld [vmem:[%s3 + $0x8] sm:$0xff]
        %v487 = vld [vmem:[%s3 + $0x10] sm:$0xff]
        %v488 = vld [vmem:[%s3 + $0x18] sm:$0xff]
        %v489 = vmul.f32 %v485, %v454
        %v490 = vmul.f32 %v486, %v464
        %v491 = vmul.f32 %v487, %v474
        %v492 = vmul.f32 %v488, %v484
        %v493 = vsub.f32 %v298, %v389
        %v494 = vsub.f32 %v299, %v392
        %v495 = vsub.f32 %v300, %v395
        %v496 = vsub.f32 %v301, %v398
        %v497 = vmul.f32 %v493, %v489
        %v498 = vmul.f32 %v494, %v490
        %v499 = vmul.f32 %v495, %v491
        %v500 = vmul.f32 %v496, %v492
        %v501 = vld [vmem:[%s4] sm:$0xff]
        %v502 = vld [vmem:[%s4 + $0x8] sm:$0xff]
        %v503 = vld [vmem:[%s4 + $0x10] sm:$0xff]
        %v504 = vld [vmem:[%s4 + $0x18] sm:$0xff]
        %v505 = vadd.f32 %v497, %v501
        %v506 = vadd.f32 %v498, %v502
        %v507 = vadd.f32 %v499, %v503
        %v508 = vadd.f32 %v500, %v504
        %510 = vset.pattern.permute.xlu0 0
        %511 = vperm.xlu0 %510, %v489
        %v512 = vpop.permute.xlu0 %511
        %515 = vset.pattern.permute.xlu0 0
        %516 = vperm.xlu0 %515, %v490
        %v517 = vpop.permute.xlu0 %516
        %520 = vset.pattern.permute.xlu0 0
        %521 = vperm.xlu0 %520, %v491
        %v522 = vpop.permute.xlu0 %521
        %525 = vset.pattern.permute.xlu0 0
        %526 = vperm.xlu0 %525, %v492
        %v527 = vpop.permute.xlu0 %526
        %v529 = vmul.f32 %v287, %v512
        %v530 = vmul.f32 %v290, %v517
        %v531 = vmul.f32 %v293, %v522
        %v532 = vmul.f32 %v296, %v527
        %534 = vset.pattern.permute.xlu0 0
        %535 = vperm.xlu0 %534, %v505
        %v536 = vpop.permute.xlu0 %535
        %539 = vset.pattern.permute.xlu0 0
        %540 = vperm.xlu0 %539, %v506
        %v541 = vpop.permute.xlu0 %540
        %544 = vset.pattern.permute.xlu0 0
        %545 = vperm.xlu0 %544, %v507
        %v546 = vpop.permute.xlu0 %545
        %549 = vset.pattern.permute.xlu0 0
        %550 = vperm.xlu0 %549, %v508
        %v551 = vpop.permute.xlu0 %550
        %v553 = vadd.f32 %v529, %v536
        %v554 = vadd.f32 %v530, %v541
        %v555 = vadd.f32 %v531, %v546
        %v556 = vadd.f32 %v532, %v551
        %v557 = vmax.f32 %v553, 0.0
        %v558 = vmax.f32 %v554, 0.0
        %v559 = vmax.f32 %v555, 0.0
        %v560 = vmax.f32 %v556, 0.0
        %561 = vst [vmem:[%s242] sm:$0xff] %v557
        %562 = vst [vmem:[%s242 + $0x8] sm:$0xff] %v558
        %563 = vst [vmem:[%s242 + $0x10] sm:$0xff] %v559
        %564 = vst [vmem:[%s242 + $0x18] sm:$0xff] %v560
        %s565 = sand.u32 %s159, 1
        %s566 = scalar_lea.sflag [#allocation3], %s565
        %s567 = sand.u32 %s159, 1
        %s568 = smul.addr %s567, 32
        %s569 = scalar_lea.vmem [#allocation2], %s568
        // Predicated region
        $region45: #{tpu_custom_call.1} parent=43 // pred_check
          %p570 = pneg %p169
        $region46: #{tpu_custom_call.1} parent=43 // pred_check_branch
          %572 = sbr.rel (%p570) target = $region48
        $region47: #{tpu_custom_call.1} parent=43 // pred_region
          %574 = vsyncadd %s566, 0
          %s575 = smul.addr %s20, 4
          %s576 = smul.addr %s575, 8
          %s577 = scalar_lea.hbm %s6, %s576
          %s578 = sshll.u32 %s569, 4
          %s579 = int_to_ptr.vmem [resolvable:$true] %s578
          %s580 = sshll.u32 %s577, 4
          %s581 = int_to_ptr.hbm [resolvable:$true] %s580
          %586 = dma.vmem_to_hbm [thread:$0]  %s579, 512, %s581, %s566, 128, 128, 8
        $region48: #{tpu_custom_call.1} parent=43 // pred_fallthru
          _
      $region44: #{tpu_custom_call.1} parent=5 // pred_fallthru
        _
      %p587 = scmp.le.s32.totalorder 2, %s15
      // Predicated region
      $region49: #{tpu_custom_call.1} parent=5 // pred_check
        %p588 = pneg %p587
      $region50: #{tpu_custom_call.1} parent=5 // pred_check_branch
        %590 = sbr.rel (%p588) target = $region52
      $region51: #{tpu_custom_call.1} parent=5 // pred_region
        %s591 = ssub.s32 %s15, 2
        // Predicated region
        $region53: #{tpu_custom_call.1} parent=51 // pred_check
          %p592 = pneg %p175
        $region54: #{tpu_custom_call.1} parent=51 // pred_check_branch
          %594 = sbr.rel (%p592) target = $region56
        $region55: #{tpu_custom_call.1} parent=51 // pred_region
          %s595 = sand.u32 %s160, 1
          %s596 = scalar_lea.sflag [#allocation3], %s595
          %s597 = sand.u32 %s160, 1
          %s598 = smul.addr %s597, 32
          %s599 = scalar_lea.vmem [#allocation2], %s598
          %601 = dma.done %s596, 512
        $region56: #{tpu_custom_call.1} parent=51 // pred_fallthru
          _
      $region52: #{tpu_custom_call.1} parent=5 // pred_fallthru
        _
    $region6: #{tpu_custom_call.1} parent=1 // loop_footer
      %s19 = sadd.s32 1, %s15
    $region7: #{tpu_custom_call.1} parent=1 // loop_footer_branch
      %14 = sbr.rel target = $region3
    $region8: #{tpu_custom_call.1} parent=1 // loop_exit
      _
    %602 = vsyncpa [#allocation3], 1
    %s603 = scalar_lea.sflag [#allocation3], 1
    %604 = vsyncpa %s603, 1

</llo_original>
